<compile_context>
chip_gen: v5e
topology: v5e:2x2
jax: 0.10.0
libtpu: 0.0.40
codegen_flags: <defaults>
</compile_context>

<pallas_src>
import functools

import jax
import jax.numpy as jnp
from jax.experimental import pallas as pl
from jax.experimental.pallas import tpu as pltpu


def _convblock_kernel(x_ref, w_ref, scale_ref, shift_ref, bias_ref, o_ref, *, H, W):
    # x_ref:     (1, Cin, H*W)        one batch element, channels in sublanes, spatial in lanes
    # w_ref:     (Cout, 9*Cin)        bf16 conv weight, taps flattened into the K dim
    # scale_ref: (Cin, 1)             BN scale  = gamma / sqrt(var + eps)      (f32)
    # shift_ref: (Cin, 1)             BN shift  = beta - mean * scale          (f32)
    # bias_ref:  (Cout, 1)            conv bias                                 (f32)
    # o_ref:     (1, Cin+Cout, H*W)   concatenated [x, conv(relu(bn(x)))] block
    Cin = x_ref.shape[1]
    HW = H * W

    x = x_ref[0]                                                    # (Cin, HW) f32

    # BN (affine with batch stats) + ReLU, in f32 on the VPU (v5e has no bf16 VALU).
    act = jnp.maximum(x * scale_ref[...] + shift_ref[...], 0.0)
    act = act.astype(jnp.bfloat16)                                  # bf16 MXU operands

    # Column (x-position) coordinate of each flattened spatial index; used to mask the
    # row-wrap that horizontal taps (dx != 0) introduce in the flattened layout.
    col = jax.lax.broadcasted_iota(jnp.int32, (Cin, HW), 1) % W

    # Zero-pad the flattened spatial axis in registers (covers the dy = +-1 row shifts).
    pad_l = W + 1
    zpad = jnp.zeros((Cin, pad_l), jnp.bfloat16)
    padded = jnp.concatenate([zpad, act, zpad], axis=1)             # (Cin, HW + 2W + 2)

    # Build the im2col matrix: 9 shifted views of the activation, stacked along channels.
    patches = []
    for dy in (-1, 0, 1):
        for dx in (-1, 0, 1):
            start = (dy + 1) * W + (dx + 1)
            p = jax.lax.slice_in_dim(padded, start, start + HW, axis=1)   # (Cin, HW)
            if dx > 0:
                p = jnp.where(col < W - dx, p, jnp.zeros_like(p))
            elif dx < 0:
                p = jnp.where(col >= -dx, p, jnp.zeros_like(p))
            patches.append(p)
    patch_mat = jnp.concatenate(patches, axis=0)                    # (9*Cin, HW) bf16

    # Single fused matmul on the MXU (K = 9*Cin), f32 accumulation, bias in the epilogue.
    conv = jnp.dot(w_ref[...], patch_mat,
                   preferred_element_type=jnp.float32)              # (Cout, HW) f32
    conv = conv + bias_ref[...]

    # Lane-dense store of the already-concatenated [x, conv] block (last dim = H*W).
    o_ref[0] = jnp.concatenate([x, conv], axis=0).astype(o_ref.dtype)


@functools.partial(jax.jit, static_argnames=("eps",))
def conv_block(x_nchw, weight_oihw, conv_bias, gamma, beta, eps=1e-5):
    """ConvBlock.forward: cat([x, Conv(ReLU(BN(x)))], dim=1). Input/output NCHW."""
    N, Cin, H, W = x_nchw.shape
    Cout = weight_oihw.shape[0]
    HW = H * W

    # --- BN batch statistics (training-mode semantics), folded into scale/shift (glue) ---
    mean = jnp.mean(x_nchw, axis=(0, 2, 3))                 # (Cin,)
    var = jnp.var(x_nchw, axis=(0, 2, 3))                   # biased variance, (Cin,)
    scale = gamma / jnp.sqrt(var + eps)                     # (Cin,)
    shift = beta - mean * scale                             # (Cin,)

    # --- layout plumbing (all free / tiny) ---
    x_flat = x_nchw.reshape(N, Cin, HW)                     # contiguous reshape, no copy
    # (Cout, Cin, 3, 3) -> (Cout, 3, 3, Cin) -> (Cout, 9*Cin), bf16 for the MXU
    w2 = jnp.transpose(weight_oihw, (0, 2, 3, 1)).reshape(Cout, 9 * Cin).astype(jnp.bfloat16)

    out_flat = pl.pallas_call(
        functools.partial(_convblock_kernel, H=H, W=W),
        out_shape=jax.ShapeDtypeStruct((N, Cin + Cout, HW), x_nchw.dtype),
        grid_spec=pltpu.PrefetchScalarGridSpec(
            num_scalar_prefetch=0,
            grid=(N,),
            in_specs=[
                pl.BlockSpec((1, Cin, HW), lambda n: (n, 0, 0)),
                pl.BlockSpec((Cout, 9 * Cin), lambda n: (0, 0)),
                pl.BlockSpec((Cin, 1), lambda n: (0, 0)),
                pl.BlockSpec((Cin, 1), lambda n: (0, 0)),
                pl.BlockSpec((Cout, 1), lambda n: (0, 0)),
            ],
            out_specs=pl.BlockSpec((1, Cin + Cout, HW), lambda n: (n, 0, 0)),
        ),
        compiler_params=pltpu.CompilerParams(dimension_semantics=("parallel",)),
    )(x_flat, w2, scale[:, None], shift[:, None], conv_bias[:, None])

    return out_flat.reshape(N, Cin + Cout, H, W)            # contiguous reshape, no copy


def _reference(x_nchw, weight_oihw, conv_bias, gamma, beta, eps=1e-5):
    """Pure-JAX reference mirroring the PyTorch forward (training-mode BN), all f32."""
    mean = jnp.mean(x_nchw, axis=(0, 2, 3), keepdims=True)
    var = jnp.var(x_nchw, axis=(0, 2, 3), keepdims=True)
    xhat = (x_nchw - mean) / jnp.sqrt(var + eps)
    bn = xhat * gamma[None, :, None, None] + beta[None, :, None, None]
    act = jnp.maximum(bn, 0.0)
    conv = jax.lax.conv_general_dilated(
        act, weight_oihw, window_strides=(1, 1), padding=((1, 1), (1, 1)),
        dimension_numbers=("NCHW", "OIHW", "NCHW"))
    conv = conv + conv_bias[None, :, None, None]
    return jnp.concatenate([x_nchw, conv], axis=1)


if __name__ == "__main__":
    N, Cin, Cout, H, W = 2, 4, 8, 16, 16

    key = jax.random.PRNGKey(0)
    k_x, k_w, k_b = jax.random.split(key, 3)

    x = jax.random.normal(k_x, (N, Cin, H, W), dtype=jnp.float32)
    weight = 0.1 * jax.random.normal(k_w, (Cout, Cin, 3, 3), dtype=jnp.float32)
    conv_bias = 0.05 * jax.random.normal(k_b, (Cout,), dtype=jnp.float32)
    gamma = jnp.ones((Cin,), jnp.float32)   # BatchNorm2d default init
    beta = jnp.zeros((Cin,), jnp.float32)

    out = conv_block(x, weight, conv_bias, gamma, beta)
    out = jax.block_until_ready(out)

    ref = _reference(x, weight, conv_bias, gamma, beta)
    assert out.shape == (N, Cin + Cout, H, W), out.shape
    # bf16 matmul operands (f32 accumulation) -> relaxed tolerance vs the f32 reference.
    max_err = float(jnp.max(jnp.abs(out - ref)))
    assert jnp.allclose(out, ref, atol=3e-2, rtol=3e-2), max_err

    print("KERNEL_OK")
</pallas_src>

<mosaic_0001>
module attributes {stable_mosaic.version = 11 : i64} {
  func.func @_convblock_kernel(%arg0: i32, %arg1: memref<1x4x256xf32, #tpu.memory_space<vmem>>, %arg2: memref<8x36xbf16, #tpu.memory_space<vmem>>, %arg3: memref<4x1xf32, #tpu.memory_space<vmem>>, %arg4: memref<4x1xf32, #tpu.memory_space<vmem>>, %arg5: memref<8x1xf32, #tpu.memory_space<vmem>>, %arg6: memref<1x12x256xf32, #tpu.memory_space<vmem>>) attributes {dimension_semantics = [#tpu.dimension_semantics<parallel>], iteration_bounds = array<i64: 2>, scalar_prefetch = 0 : i64, scratch_operands = 0 : i64, tpu.core_type = #tpu.core_type<tc>, window_params = [{transform_indices = @transform_0, window_bounds = array<i64: 1, 4, 256>}, {pipeline_mode = #tpu.pipeline_mode<synchronous>, transform_indices = @transform_1, window_bounds = array<i64: 8, 36>}, {pipeline_mode = #tpu.pipeline_mode<synchronous>, transform_indices = @transform_2, window_bounds = array<i64: 4, 1>}, {pipeline_mode = #tpu.pipeline_mode<synchronous>, transform_indices = @transform_3, window_bounds = array<i64: 4, 1>}, {pipeline_mode = #tpu.pipeline_mode<synchronous>, transform_indices = @transform_4, window_bounds = array<i64: 8, 1>}, {transform_indices = @transform_5, window_bounds = array<i64: 1, 12, 256>}]} {
    %c0 = arith.constant 0 : index
    %c0_0 = arith.constant 0 : index
    %c0_1 = arith.constant 0 : index
    %0 = vector.load %arg1[%c0, %c0_0, %c0_1] : memref<1x4x256xf32, #tpu.memory_space<vmem>>, vector<1x4x256xf32>
    %1 = vector.shape_cast %0 : vector<1x4x256xf32> to vector<4x256xf32>
    %c0_2 = arith.constant 0 : index
    %c0_3 = arith.constant 0 : index
    %2 = vector.load %arg3[%c0_2, %c0_3] : memref<4x1xf32, #tpu.memory_space<vmem>>, vector<4x1xf32>
    %3 = vector.broadcast %2 : vector<4x1xf32> to vector<4x256xf32>
    %4 = arith.mulf %1, %3 : vector<4x256xf32>
    %c0_4 = arith.constant 0 : index
    %c0_5 = arith.constant 0 : index
    %5 = vector.load %arg4[%c0_4, %c0_5] : memref<4x1xf32, #tpu.memory_space<vmem>>, vector<4x1xf32>
    %6 = vector.broadcast %5 : vector<4x1xf32> to vector<4x256xf32>
    %7 = arith.addf %4, %6 : vector<4x256xf32>
    %cst = arith.constant 0.000000e+00 : f32
    %8 = vector.broadcast %cst : f32 to vector<4x256xf32>
    %9 = arith.maximumf %7, %8 : vector<4x256xf32>
    %10 = arith.truncf %9 : vector<4x256xf32> to vector<4x256xbf16>
    %11 = tpu.iota {dimensions = array<i32: 1>} : vector<4x256xi32>
    %c16_i32 = arith.constant 16 : i32
    %c0_i32 = arith.constant 0 : i32
    %12 = arith.cmpi eq, %c16_i32, %c0_i32 : i32
    %c1_i32 = arith.constant 1 : i32
    %13 = arith.select %12, %c1_i32, %c16_i32 : i32
    %14 = vector.broadcast %13 : i32 to vector<4x256xi32>
    %15 = arith.remsi %11, %14 : vector<4x256xi32>
    %c0_i32_6 = arith.constant 0 : i32
    %16 = vector.broadcast %c0_i32_6 : i32 to vector<4x256xi32>
    %17 = arith.cmpi ne, %15, %16 : vector<4x256xi32>
    %c0_i32_7 = arith.constant 0 : i32
    %18 = vector.broadcast %c0_i32_7 : i32 to vector<4x256xi32>
    %19 = arith.cmpi slt, %15, %18 : vector<4x256xi32>
    %c0_i32_8 = arith.constant 0 : i32
    %20 = arith.cmpi slt, %13, %c0_i32_8 : i32
    %21 = vector.broadcast %20 : i1 to vector<4x256xi1>
    %22 = vector.broadcast %21 : vector<4x256xi1> to vector<4x256xi1>
    %23 = arith.xori %19, %22 : vector<4x256xi1>
    %24 = arith.andi %23, %17 : vector<4x256xi1>
    %25 = vector.broadcast %13 : i32 to vector<4x256xi32>
    %26 = arith.addi %15, %25 : vector<4x256xi32>
    %27 = arith.select %24, %26, %15 : vector<4x256xi1>, vector<4x256xi32>
    %cst_9 = arith.constant 0.000000e+00 : bf16
    %28 = vector.broadcast %cst_9 : bf16 to vector<4x17xbf16>
    %29 = tpu.concatenate %28, %10, %28 in 1 : vector<4x17xbf16>, vector<4x256xbf16>, vector<4x17xbf16> -> vector<4x290xbf16>
    %30 = vector.extract_strided_slice %29 {offsets = [0, 0], sizes = [4, 256], strides = [1, 1]} : vector<4x290xbf16> to vector<4x256xbf16>
    %c1_i32_10 = arith.constant 1 : i32
    %31 = vector.broadcast %c1_i32_10 : i32 to vector<4x256xi32>
    %32 = arith.cmpi sge, %27, %31 : vector<4x256xi32>
    %cst_11 = arith.constant 0.000000e+00 : bf16
    %33 = vector.broadcast %cst_11 : bf16 to vector<4x256xbf16>
    %34 = arith.select %32, %30, %33 : vector<4x256xi1>, vector<4x256xbf16>
    %35 = vector.extract_strided_slice %29 {offsets = [0, 1], sizes = [4, 256], strides = [1, 1]} : vector<4x290xbf16> to vector<4x256xbf16>
    %36 = vector.extract_strided_slice %29 {offsets = [0, 2], sizes = [4, 256], strides = [1, 1]} : vector<4x290xbf16> to vector<4x256xbf16>
    %c15_i32 = arith.constant 15 : i32
    %37 = vector.broadcast %c15_i32 : i32 to vector<4x256xi32>
    %38 = arith.cmpi slt, %27, %37 : vector<4x256xi32>
    %cst_12 = arith.constant 0.000000e+00 : bf16
    %39 = vector.broadcast %cst_12 : bf16 to vector<4x256xbf16>
    %40 = arith.select %38, %36, %39 : vector<4x256xi1>, vector<4x256xbf16>
    %41 = vector.extract_strided_slice %29 {offsets = [0, 16], sizes = [4, 256], strides = [1, 1]} : vector<4x290xbf16> to vector<4x256xbf16>
    %c1_i32_13 = arith.constant 1 : i32
    %42 = vector.broadcast %c1_i32_13 : i32 to vector<4x256xi32>
    %43 = arith.cmpi sge, %27, %42 : vector<4x256xi32>
    %cst_14 = arith.constant 0.000000e+00 : bf16
    %44 = vector.broadcast %cst_14 : bf16 to vector<4x256xbf16>
    %45 = arith.select %43, %41, %44 : vector<4x256xi1>, vector<4x256xbf16>
    %46 = vector.extract_strided_slice %29 {offsets = [0, 17], sizes = [4, 256], strides = [1, 1]} : vector<4x290xbf16> to vector<4x256xbf16>
    %47 = vector.extract_strided_slice %29 {offsets = [0, 18], sizes = [4, 256], strides = [1, 1]} : vector<4x290xbf16> to vector<4x256xbf16>
    %c15_i32_15 = arith.constant 15 : i32
    %48 = vector.broadcast %c15_i32_15 : i32 to vector<4x256xi32>
    %49 = arith.cmpi slt, %27, %48 : vector<4x256xi32>
    %cst_16 = arith.constant 0.000000e+00 : bf16
    %50 = vector.broadcast %cst_16 : bf16 to vector<4x256xbf16>
    %51 = arith.select %49, %47, %50 : vector<4x256xi1>, vector<4x256xbf16>
    %52 = vector.extract_strided_slice %29 {offsets = [0, 32], sizes = [4, 256], strides = [1, 1]} : vector<4x290xbf16> to vector<4x256xbf16>
    %c1_i32_17 = arith.constant 1 : i32
    %53 = vector.broadcast %c1_i32_17 : i32 to vector<4x256xi32>
    %54 = arith.cmpi sge, %27, %53 : vector<4x256xi32>
    %cst_18 = arith.constant 0.000000e+00 : bf16
    %55 = vector.broadcast %cst_18 : bf16 to vector<4x256xbf16>
    %56 = arith.select %54, %52, %55 : vector<4x256xi1>, vector<4x256xbf16>
    %57 = vector.extract_strided_slice %29 {offsets = [0, 33], sizes = [4, 256], strides = [1, 1]} : vector<4x290xbf16> to vector<4x256xbf16>
    %58 = vector.extract_strided_slice %29 {offsets = [0, 34], sizes = [4, 256], strides = [1, 1]} : vector<4x290xbf16> to vector<4x256xbf16>
    %c15_i32_19 = arith.constant 15 : i32
    %59 = vector.broadcast %c15_i32_19 : i32 to vector<4x256xi32>
    %60 = arith.cmpi slt, %27, %59 : vector<4x256xi32>
    %cst_20 = arith.constant 0.000000e+00 : bf16
    %61 = vector.broadcast %cst_20 : bf16 to vector<4x256xbf16>
    %62 = arith.select %60, %58, %61 : vector<4x256xi1>, vector<4x256xbf16>
    %63 = tpu.concatenate %34, %35, %40, %45, %46, %51, %56, %57, %62 in 0 : vector<4x256xbf16>, vector<4x256xbf16>, vector<4x256xbf16>, vector<4x256xbf16>, vector<4x256xbf16>, vector<4x256xbf16>, vector<4x256xbf16>, vector<4x256xbf16>, vector<4x256xbf16> -> vector<36x256xbf16>
    %c0_21 = arith.constant 0 : index
    %c0_22 = arith.constant 0 : index
    %64 = vector.load %arg2[%c0_21, %c0_22] : memref<8x36xbf16, #tpu.memory_space<vmem>>, vector<8x36xbf16>
    %cst_23 = arith.constant dense<0.000000e+00> : vector<8x256xf32>
    %65 = tpu.matmul %64, %63, %cst_23 {dimension_numbers = #tpu.dot_dimension_numbers<[1], [0], [0], [1], [0, 0, 1, 1], [], []>} : vector<8x36xbf16>, vector<36x256xbf16>, vector<8x256xf32> -> vector<8x256xf32>
    %c0_24 = arith.constant 0 : index
    %c0_25 = arith.constant 0 : index
    %66 = vector.load %arg5[%c0_24, %c0_25] : memref<8x1xf32, #tpu.memory_space<vmem>>, vector<8x1xf32>
    %67 = vector.broadcast %66 : vector<8x1xf32> to vector<8x256xf32>
    %68 = arith.addf %65, %67 : vector<8x256xf32>
    %69 = tpu.concatenate %1, %68 in 0 : vector<4x256xf32>, vector<8x256xf32> -> vector<12x256xf32>
    %c0_26 = arith.constant 0 : index
    %c0_27 = arith.constant 0 : index
    %c0_28 = arith.constant 0 : index
    %70 = vector.load %arg6[%c0_26, %c0_27, %c0_28] : memref<1x12x256xf32, #tpu.memory_space<vmem>>, vector<1x12x256xf32>
    %71 = vector.shape_cast %70 : vector<1x12x256xf32> to vector<12x256xf32>
    %72 = vector.shape_cast %69 : vector<12x256xf32> to vector<1x12x256xf32>
    tpu.vector_store %arg6[%c0_26, %c0_27, %c0_28], %72 {strides = array<i32>} : memref<1x12x256xf32, #tpu.memory_space<vmem>>, vector<1x12x256xf32>,
    return
  }
  func.func @transform_0(%arg0: i32) -> (i32, i32, i32) {
    %c0_i32 = arith.constant 0 : i32
    %c0_i32_0 = arith.constant 0 : i32
    %c0_i32_1 = arith.constant 0 : i32
    return %arg0, %c0_i32, %c0_i32_0 : i32, i32, i32
  }
  func.func @transform_1(%arg0: i32) -> (i32, i32) {
    %c0_i32 = arith.constant 0 : i32
    %c0_i32_0 = arith.constant 0 : i32
    %c0_i32_1 = arith.constant 0 : i32
    return %c0_i32, %c0_i32_0 : i32, i32
  }
  func.func @transform_2(%arg0: i32) -> (i32, i32) {
    %c0_i32 = arith.constant 0 : i32
    %c0_i32_0 = arith.constant 0 : i32
    %c0_i32_1 = arith.constant 0 : i32
    return %c0_i32, %c0_i32_0 : i32, i32
  }
  func.func @transform_3(%arg0: i32) -> (i32, i32) {
    %c0_i32 = arith.constant 0 : i32
    %c0_i32_0 = arith.constant 0 : i32
    %c0_i32_1 = arith.constant 0 : i32
    return %c0_i32, %c0_i32_0 : i32, i32
  }
  func.func @transform_4(%arg0: i32) -> (i32, i32) {
    %c0_i32 = arith.constant 0 : i32
    %c0_i32_0 = arith.constant 0 : i32
    %c0_i32_1 = arith.constant 0 : i32
    return %c0_i32, %c0_i32_0 : i32, i32
  }
  func.func @transform_5(%arg0: i32) -> (i32, i32, i32) {
    %c0_i32 = arith.constant 0 : i32
    %c0_i32_0 = arith.constant 0 : i32
    %c0_i32_1 = arith.constant 0 : i32
    return %arg0, %c0_i32, %c0_i32_0 : i32, i32, i32
  }
}

</mosaic_0001>

<llo_original>
// kernel: conv_block.1
$region0: #{conv_block.1}
  #allocation0 [shape = 'u32[]', space=smem, size = 0x4, offset = 0x4, fixed_abs, tag = 'smem constant byte address 0x4 - core index']
  #allocation1 [shape = 'u32[72,128]{1,0:T(1,128)}', space=vmem, size = 0x9000, scoped, tag = 'internal scratch']
  %s0 = inlined_call_operand.vmem [shape: f32[2,4,256], index: 0, kind: input, shape index: {}]
  %s1 = inlined_call_operand.vmem [shape: bf16[8,36], index: 1, kind: input, shape index: {}]
  %s2 = inlined_call_operand.vmem [shape: f32[4,1], index: 2, kind: input, shape index: {}]
  %s3 = inlined_call_operand.vmem [shape: f32[4,1], index: 3, kind: input, shape index: {}]
  %s4 = inlined_call_operand.vmem [shape: f32[8,1], index: 4, kind: input, shape index: {}]
  %s5 = inlined_call_operand.vmem [shape: f32[2,12,256], index: 5, kind: output, shape index: {}]
  %s6 = sld [smem:[#allocation0]]
  $region53: #{conv_block.1} parent=0
    _
  %s8 = ssub.s32 1, %s6
  %s9 = scalar_select 0, %s8, %s6
  loop: start=0, step=1, limit=4
  $region2: #{conv_block.1} parent=0 // loop_pre_header
    _
  $region3: #{conv_block.1} parent=0 // loop_header
    %s11 = sphi 0, %s15
    %p12 = scmp.ge.s32.totalorder %s11, 4
    %s21 = sphi 0, %s23
    %s24 = sphi 0, %s21
    %s25 = sphi 0, %s24
    %s41 = sphi 0, %s25
    %s45 = sphi 0, %s45
    %s47 = sphi 0, %s45
    %s48 = sphi 0, %s47
    %s62 = sphi 0, %s48
    %s66 = sphi 0, %s66
    %s68 = sphi 0, %s66
    %s69 = sphi 0, %s68
    %s83 = sphi 0, %s69
    %s87 = sphi 0, %s87
    %s89 = sphi 0, %s87
    %s90 = sphi 0, %s89
    %s104 = sphi 0, %s90
    %s108 = sphi 0, %s108
    %s110 = sphi 0, %s108
    %s111 = sphi 0, %s110
    %s125 = sphi 0, %s111
    %s131 = sphi 0, %s133
    %s134 = sphi 0, %s131
    %s135 = sphi 0, %s134
    %s151 = sphi 0, %s135
  $region4: #{conv_block.1} parent=0 // loop_header_branch
    %14 = sbr.rel (%p12) target = $region8
  $region5: #{conv_block.1} parent=0 // loop_body
    %s16 = ssub.s32 %s11, 1
    %s17 = ssub.s32 %s11, 2
    %s18 = sadd.s32 %s11, 1
    %s19 = ssub.s32 %s11, %s18
    %p20 = scmp.eq.s32.totalorder %s19, 0
    %s22 = sadd.s32 %s21, 1
    %s23 = scalar_select %p20, %s21, %s22
    %p26 = pneg %p20
    %p27 = scmp.eq.s32.totalorder %s11, 1
    %p28 = por %p26, %p27
    %p29 = scmp.ne.s32.totalorder %s21, %s24
    %p30 = scmp.eq.s32.totalorder %s11, 0
    %p31 = por %p29, %p30
    %p32 = scmp.ne.s32.totalorder %s21, %s24
    %p33 = scmp.eq.s32.totalorder %s16, 1
    %p34 = por %p32, %p33
    %p35 = scmp.ne.s32.totalorder %s24, %s25
    %p36 = scmp.eq.s32.totalorder %s16, 0
    %p37 = por %p35, %p36
    %p38 = scmp.ne.s32.totalorder %s24, %s25
    %p39 = scmp.eq.s32.totalorder %s17, 1
    %p40 = por %p38, %p39
    %p42 = scmp.ne.s32.totalorder %s25, %s41
    %p43 = scmp.eq.s32.totalorder %s17, 0
    %p44 = por %p42, %p43
    %s46 = sadd.s32 %s45, 1
    %p49 = scmp.eq.s32.totalorder %s11, 1
    %p50 = scmp.ne.s32.totalorder %s45, %s47
    %p51 = scmp.eq.s32.totalorder %s11, 0
    %p52 = por %p50, %p51
    %p53 = scmp.ne.s32.totalorder %s45, %s47
    %p54 = scmp.eq.s32.totalorder %s16, 1
    %p55 = por %p53, %p54
    %p56 = scmp.ne.s32.totalorder %s47, %s48
    %p57 = scmp.eq.s32.totalorder %s16, 0
    %p58 = por %p56, %p57
    %p59 = scmp.ne.s32.totalorder %s47, %s48
    %p60 = scmp.eq.s32.totalorder %s17, 1
    %p61 = por %p59, %p60
    %p63 = scmp.ne.s32.totalorder %s48, %s62
    %p64 = scmp.eq.s32.totalorder %s17, 0
    %p65 = por %p63, %p64
    %s67 = sadd.s32 %s66, 1
    %p70 = scmp.eq.s32.totalorder %s11, 1
    %p71 = scmp.ne.s32.totalorder %s66, %s68
    %p72 = scmp.eq.s32.totalorder %s11, 0
    %p73 = por %p71, %p72
    %p74 = scmp.ne.s32.totalorder %s66, %s68
    %p75 = scmp.eq.s32.totalorder %s16, 1
    %p76 = por %p74, %p75
    %p77 = scmp.ne.s32.totalorder %s68, %s69
    %p78 = scmp.eq.s32.totalorder %s16, 0
    %p79 = por %p77, %p78
    %p80 = scmp.ne.s32.totalorder %s68, %s69
    %p81 = scmp.eq.s32.totalorder %s17, 1
    %p82 = por %p80, %p81
    %p84 = scmp.ne.s32.totalorder %s69, %s83
    %p85 = scmp.eq.s32.totalorder %s17, 0
    %p86 = por %p84, %p85
    %s88 = sadd.s32 %s87, 1
    %p91 = scmp.eq.s32.totalorder %s11, 1
    %p92 = scmp.ne.s32.totalorder %s87, %s89
    %p93 = scmp.eq.s32.totalorder %s11, 0
    %p94 = por %p92, %p93
    %p95 = scmp.ne.s32.totalorder %s87, %s89
    %p96 = scmp.eq.s32.totalorder %s16, 1
    %p97 = por %p95, %p96
    %p98 = scmp.ne.s32.totalorder %s89, %s90
    %p99 = scmp.eq.s32.totalorder %s16, 0
    %p100 = por %p98, %p99
    %p101 = scmp.ne.s32.totalorder %s89, %s90
    %p102 = scmp.eq.s32.totalorder %s17, 1
    %p103 = por %p101, %p102
    %p105 = scmp.ne.s32.totalorder %s90, %s104
    %p106 = scmp.eq.s32.totalorder %s17, 0
    %p107 = por %p105, %p106
    %s109 = sadd.s32 %s108, 1
    %p112 = scmp.eq.s32.totalorder %s11, 1
    %p113 = scmp.ne.s32.totalorder %s108, %s110
    %p114 = scmp.eq.s32.totalorder %s11, 0
    %p115 = por %p113, %p114
    %p116 = scmp.ne.s32.totalorder %s108, %s110
    %p117 = scmp.eq.s32.totalorder %s16, 1
    %p118 = por %p116, %p117
    %p119 = scmp.ne.s32.totalorder %s110, %s111
    %p120 = scmp.eq.s32.totalorder %s16, 0
    %p121 = por %p119, %p120
    %p122 = scmp.ne.s32.totalorder %s110, %s111
    %p123 = scmp.eq.s32.totalorder %s17, 1
    %p124 = por %p122, %p123
    %p126 = scmp.ne.s32.totalorder %s111, %s125
    %p127 = scmp.eq.s32.totalorder %s17, 0
    %p128 = por %p126, %p127
    %s129 = ssub.s32 %s11, %s18
    %p130 = scmp.eq.s32.totalorder %s129, 0
    %s132 = sadd.s32 %s131, 1
    %s133 = scalar_select %p130, %s131, %s132
    %p136 = pneg %p130
    %p137 = scmp.eq.s32.totalorder %s11, 1
    %p138 = por %p136, %p137
    %p139 = scmp.ne.s32.totalorder %s131, %s134
    %p140 = scmp.eq.s32.totalorder %s11, 0
    %p141 = por %p139, %p140
    %p142 = scmp.ne.s32.totalorder %s131, %s134
    %p143 = scmp.eq.s32.totalorder %s16, 1
    %p144 = por %p142, %p143
    %p145 = scmp.ne.s32.totalorder %s134, %s135
    %p146 = scmp.eq.s32.totalorder %s16, 0
    %p147 = por %p145, %p146
    %p148 = scmp.ne.s32.totalorder %s134, %s135
    %p149 = scmp.eq.s32.totalorder %s17, 1
    %p150 = por %p148, %p149
    %p152 = scmp.ne.s32.totalorder %s135, %s151
    %p153 = scmp.eq.s32.totalorder %s17, 0
    %p154 = por %p152, %p153
    %p155 = scmp.le.s32.totalorder 1, %s11
    %p156 = scmp.lt.s32.totalorder %s11, 3
    %p157 = pnand %p155, %p156
    %p158 = pneg %p157
    // Predicated region
    $region9: #{conv_block.1} parent=5 // pred_check
      _
    $region10: #{conv_block.1} parent=5 // pred_check_branch
      %160 = sbr.rel (%p157) target = $region12
    $region11: #{conv_block.1} parent=5 // pred_region
      %s161 = ssub.s32 %s11, 1
      // Predicated region
      $region13: #{conv_block.1} parent=11 // pred_check
        %p162 = pneg %p58
      $region14: #{conv_block.1} parent=11 // pred_check_branch
        %164 = sbr.rel (%p162) target = $region16
      $region15: #{conv_block.1} parent=11 // pred_region
        _
      $region16: #{conv_block.1} parent=11 // pred_fallthru
        _
      // Predicated region
      $region17: #{conv_block.1} parent=11 // pred_check
        %p165 = pneg %p79
      $region18: #{conv_block.1} parent=11 // pred_check_branch
        %167 = sbr.rel (%p165) target = $region20
      $region19: #{conv_block.1} parent=11 // pred_region
        _
      $region20: #{conv_block.1} parent=11 // pred_fallthru
        _
      // Predicated region
      $region21: #{conv_block.1} parent=11 // pred_check
        %p168 = pneg %p100
      $region22: #{conv_block.1} parent=11 // pred_check_branch
        %170 = sbr.rel (%p168) target = $region24
      $region23: #{conv_block.1} parent=11 // pred_region
        _
      $region24: #{conv_block.1} parent=11 // pred_fallthru
        _
      // Predicated region
      $region25: #{conv_block.1} parent=11 // pred_check
        %p171 = pneg %p121
      $region26: #{conv_block.1} parent=11 // pred_check_branch
        %173 = sbr.rel (%p171) target = $region28
      $region27: #{conv_block.1} parent=11 // pred_region
        _
      $region28: #{conv_block.1} parent=11 // pred_fallthru
        _
    $region12: #{conv_block.1} parent=5 // pred_fallthru
      _
    %p174 = scmp.lt.s32.totalorder %s11, 2
    // Predicated region
    $region29: #{conv_block.1} parent=5 // pred_check
      %p175 = pneg %p174
    $region30: #{conv_block.1} parent=5 // pred_check_branch
      %177 = sbr.rel (%p175) target = $region32
    $region31: #{conv_block.1} parent=5 // pred_region
      // Predicated region
      $region33: #{conv_block.1} parent=31 // pred_check
        %p178 = pneg %p31
      $region34: #{conv_block.1} parent=31 // pred_check_branch
        %180 = sbr.rel (%p178) target = $region36
      $region35: #{conv_block.1} parent=31 // pred_region
        %p181 = scmp.lt.s32.totalorder %s11, 1
        %s182 = scalar_select %p181, %s11, 1
        %s183 = smul.addr %s182, 2
        %s184 = smul.addr %s183, 4
        %s185 = scalar_lea.vmem %s0, %s184
      $region36: #{conv_block.1} parent=31 // pred_fallthru
        _
    $region32: #{conv_block.1} parent=5 // pred_fallthru
      _
    %p186 = scmp.le.s32.totalorder 1, %s11
    %p187 = scmp.lt.s32.totalorder %s11, 3
    %p188 = pnand %p186, %p187
    %p189 = pneg %p188
    // Predicated region
    $region37: #{conv_block.1} parent=5 // pred_check
      _
    $region38: #{conv_block.1} parent=5 // pred_check_branch
      %191 = sbr.rel (%p188) target = $region40
    $region39: #{conv_block.1} parent=5 // pred_region
      %s192 = ssub.s32 %s11, 1
      %p193 = scmp.lt.s32.totalorder %s16, 1
      %s194 = scalar_select %p193, %s16, 1
      %s195 = smul.addr %s194, 2
      %s196 = smul.addr %s195, 4
      %s197 = scalar_lea.vmem %s0, %s196
      %p198 = pneg %p37
      %p199 = pneg %p34
      %p200 = pneg %p58
      %p201 = pneg %p55
      %p202 = pneg %p79
      %p203 = pneg %p76
      %p204 = pneg %p100
      %p205 = pneg %p97
      %p206 = pneg %p121
      %p207 = pneg %p118
      %p208 = pneg %p147
      %p209 = pneg %p144
      %p210 = scmp.lt.s32.totalorder %s16, 1
      %s211 = scalar_select %p210, %s16, 1
      %s212 = smul.addr %s211, 4
      %s213 = smul.addr %s212, 8
      %s214 = scalar_lea.vmem %s5, %s213
      %p215 = scmp.lt.s32.totalorder %s16, 1
      %s216 = scalar_select %p215, %s16, 1
      %s217 = smul.addr %s216, 2
      %s218 = smul.addr %s217, 4
      %s219 = scalar_lea.vmem %s0, %s218
      %p220 = scmp.lt.s32.totalorder %s16, 1
      %s221 = scalar_select %p220, %s16, 1
      %s222 = smul.addr %s221, 4
      %s223 = smul.addr %s222, 8
      %s224 = scalar_lea.vmem %s5, %s223
      %v228 = vld [vmem:[%s219] sm:$0xff]
      %v229 = vld [vmem:[%s2] sm:$0xf]
      %231 = vset.pattern.permute.xlu0 0
      %232 = vperm.xlu0 %231, %v229
      %v233 = vpop.permute.xlu0 %232
      %v235 = vunpack.c.l.s4 839922192
      %v236 = vunpack.c.0.s8 %v235
      %v237 = vperm.slane %v233, %v236
      %v239 = vmul.f32 %v228, %v237
      %v240 = vld [vmem:[%s3] sm:$0xf]
      %242 = vset.pattern.permute.xlu0 0
      %243 = vperm.xlu0 %242, %v240
      %v244 = vpop.permute.xlu0 %243
      %v246 = vunpack.c.l.s4 839922192
      %v247 = vunpack.c.0.s8 %v246
      %v248 = vperm.slane %v244, %v247
      %v250 = vadd.f32 %v239, %v248
      %v251 = vmax.f32 %v250, 0.0
      %253 = vst [vmem:[#allocation1] ss:$2 sm:$0xff] %v251
      %v254 = vld.sshfl [vmem:[#allocation1] sm:$0xff pattern:$0x75316420]
      %v255 = vld.sshfl [vmem:[#allocation1 + $0x8] sm:$0xff pattern:$0x75316420]
      %v258 = vpack.c.bf16 %v255, %v254
      %v259 = vlaneseq
      %v260 = vand.u32 %v259, 127
      %v261 = vadd.s32 %v260, 128
      %vm262 = vcmp.lt.s32.totalorder %v260, 0
      %v263 = vsub.s32 0, %v260
      %v264 = vsel %vm262, %v263, %v260
      %v265 = vshrl.u32 %v264, 4
      %v266 = vand.u32 %v264, 15
      %v267 = vsub.s32 0, %v266
      %v268 = vsel %vm262, %v267, %v266
      %vm269 = vcmp.lt.s32.totalorder %v261, 0
      %v270 = vsub.s32 0, %v261
      %v271 = vsel %vm269, %v270, %v261
      %v272 = vshrl.u32 %v271, 4
      %v273 = vand.u32 %v271, 15
      %v274 = vsub.s32 0, %v273
      %v275 = vsel %vm269, %v274, %v273
      %vm276 = vcmp.ne.s32.totalorder %v268, 0
      %vm277 = vcmp.ne.s32.totalorder %v275, 0
      %vm278 = vcmp.lt.s32.totalorder %v268, 0
      %vm279 = vcmp.lt.s32.totalorder %v275, 0
      %vm280 = vmand %vm278, %vm276
      %vm281 = vmand %vm279, %vm277
      %v282 = vadd.s32 %v268, 16
      %v283 = vadd.s32 %v275, 16
      %v284 = vsel %vm280, %v282, %v268
      %v285 = vsel %vm281, %v283, %v275
      %v287 = vunpack.c.l.b16 %v258
      %v288 = vunpack.c.h.b16 %v258
      %v289 = vpack.c.b16 %v287, %v287
      %v290 = vpack.c.b16 %v288, %v288
      %291 = vrot.lane.b32.xlu0 %v289, 17
      %v292 = vpop.permute.xlu0 %291
      %293 = vrot.lane.b32.xlu0 %v290, 17
      %v294 = vpop.permute.xlu0 %293
      %vm295 = vcmask 138240
      %v296 = vsel %vm295, %v292, %v294
      %vm298 = vcmask 138240
      %v301 = vsel %vm298, 0, %v292
      %v304 = vsel %vm298, %v294, 0
      %vm306 = vcmp.ge.s32.totalorder %v284, 1
      %vm307 = vcmp.ge.s32.totalorder %v285, 1
      %vm308 = vmpackc.low %vm307, %vm306
      %v309 = vsel %vm308, 65537, 0
      %v310 = vperm.slane %v309, 0
      %v311 = vperm.slane %v309, 4
      %v312 = vunpack.c.l.b16 %v310
      %v313 = vunpack.c.h.b16 %v310
      %v314 = vunpack.c.l.b16 0
      %v315 = vunpack.c.h.b16 0
      %vm316 = vcmp.ne.s32.totalorder %v312, %v314
      %vm317 = vcmp.ne.s32.totalorder %v313, %v315
      %vm318 = vmpackc.low %vm317, %vm316
      %v319 = vunpack.c.l.b16 %v311
      %v320 = vunpack.c.h.b16 %v311
      %v321 = vunpack.c.l.b16 0
      %v322 = vunpack.c.h.b16 0
      %vm323 = vcmp.ne.s32.totalorder %v319, %v321
      %vm324 = vcmp.ne.s32.totalorder %v320, %v322
      %vm325 = vmpackc.low %vm324, %vm323
      %v326 = vsel %vm318, %v301, 0
      %v327 = vsel %vm325, %v296, 0
      %vm328 = vcmp.lt.s32.totalorder %v284, 15
      %vm329 = vcmp.lt.s32.totalorder %v285, 15
      %vm330 = vmpackc.low %vm329, %vm328
      %v331 = vsel %vm330, 65537, 0
      %v332 = vperm.slane %v331, 0
      %v333 = vperm.slane %v331, 4
      %334 = vrot.lane.b32.xlu0 %v332, 2
      %v335 = vpop.permute.xlu0 %334
      %336 = vrot.lane.b32.xlu0 %v333, 2
      %v337 = vpop.permute.xlu0 %336
      %vm338 = vcmask 15360
      %v339 = vsel %vm338, %v335, %v337
      %v340 = vunpack.c.l.b16 %v335
      %v341 = vunpack.c.h.b16 %v335
      %v342 = vunpack.c.l.b16 0
      %v343 = vunpack.c.h.b16 0
      %vm344 = vcmp.ne.s32.totalorder %v340, %v342
      %vm345 = vcmp.ne.s32.totalorder %v341, %v343
      %vm346 = vmpackc.low %vm345, %vm344
      %v347 = vunpack.c.l.b16 %v339
      %v348 = vunpack.c.h.b16 %v339
      %v349 = vunpack.c.l.b16 0
      %v350 = vunpack.c.h.b16 0
      %vm351 = vcmp.ne.s32.totalorder %v347, %v349
      %vm352 = vcmp.ne.s32.totalorder %v348, %v350
      %vm353 = vmpackc.low %vm352, %vm351
      %v354 = vunpack.c.l.b16 %v337
      %v355 = vunpack.c.h.b16 %v337
      %v356 = vunpack.c.l.b16 0
      %v357 = vunpack.c.h.b16 0
      %vm358 = vcmp.ne.s32.totalorder %v354, %v356
      %vm359 = vcmp.ne.s32.totalorder %v355, %v357
      %vm360 = vmpackc.low %vm359, %vm358
      %v361 = vsel %vm346, %v301, 0
      %v362 = vsel %vm353, %v296, 0
      %v363 = vsel %vm360, %v304, 0
      %364 = vrot.lane.b32.xlu0 %v310, 16
      %v365 = vpop.permute.xlu0 %364
      %366 = vrot.lane.b32.xlu0 %v311, 16
      %v367 = vpop.permute.xlu0 %366
      %vm368 = vcmask 130048
      %v369 = vsel %vm368, %v365, %v367
      %v370 = vunpack.c.l.b16 %v365
      %v371 = vunpack.c.h.b16 %v365
      %v372 = vunpack.c.l.b16 0
      %v373 = vunpack.c.h.b16 0
      %vm374 = vcmp.ne.s32.totalorder %v370, %v372
      %vm375 = vcmp.ne.s32.totalorder %v371, %v373
      %vm376 = vmpackc.low %vm375, %vm374
      %v377 = vunpack.c.l.b16 %v369
      %v378 = vunpack.c.h.b16 %v369
      %v379 = vunpack.c.l.b16 0
      %v380 = vunpack.c.h.b16 0
      %vm381 = vcmp.ne.s32.totalorder %v377, %v379
      %vm382 = vcmp.ne.s32.totalorder %v378, %v380
      %vm383 = vmpackc.low %vm382, %vm381
      %v384 = vunpack.c.l.b16 %v367
      %v385 = vunpack.c.h.b16 %v367
      %v386 = vunpack.c.l.b16 0
      %v387 = vunpack.c.h.b16 0
      %vm388 = vcmp.ne.s32.totalorder %v384, %v386
      %vm389 = vcmp.ne.s32.totalorder %v385, %v387
      %vm390 = vmpackc.low %vm389, %vm388
      %v391 = vsel %vm376, %v301, 0
      %v392 = vsel %vm383, %v296, 0
      %v393 = vsel %vm390, %v304, 0
      %394 = vrot.lane.b32.xlu0 %v332, 18
      %v395 = vpop.permute.xlu0 %394
      %396 = vrot.lane.b32.xlu0 %v333, 18
      %v397 = vpop.permute.xlu0 %396
      %vm398 = vcmask 146432
      %v399 = vsel %vm398, %v395, %v397
      %v400 = vunpack.c.l.b16 %v395
      %v401 = vunpack.c.h.b16 %v395
      %v402 = vunpack.c.l.b16 0
      %v403 = vunpack.c.h.b16 0
      %vm404 = vcmp.ne.s32.totalorder %v400, %v402
      %vm405 = vcmp.ne.s32.totalorder %v401, %v403
      %vm406 = vmpackc.low %vm405, %vm404
      %v407 = vunpack.c.l.b16 %v399
      %v408 = vunpack.c.h.b16 %v399
      %v409 = vunpack.c.l.b16 0
      %v410 = vunpack.c.h.b16 0
      %vm411 = vcmp.ne.s32.totalorder %v407, %v409
      %vm412 = vcmp.ne.s32.totalorder %v408, %v410
      %vm413 = vmpackc.low %vm412, %vm411
      %v414 = vunpack.c.l.b16 %v397
      %v415 = vunpack.c.h.b16 %v397
      %v416 = vunpack.c.l.b16 0
      %v417 = vunpack.c.h.b16 0
      %vm418 = vcmp.ne.s32.totalorder %v414, %v416
      %vm419 = vcmp.ne.s32.totalorder %v415, %v417
      %vm420 = vmpackc.low %vm419, %vm418
      %v421 = vsel %vm406, %v301, 0
      %v422 = vsel %vm413, %v296, 0
      %v423 = vsel %vm420, %v304, 0
      %424 = vrot.lane.b32.xlu0 %v310, 32
      %v425 = vpop.permute.xlu0 %424
      %426 = vrot.lane.b32.xlu0 %v311, 32
      %v427 = vpop.permute.xlu0 %426
      %vm428 = vcmask 261120
      %v429 = vsel %vm428, %v425, %v427
      %v430 = vunpack.c.l.b16 %v425
      %v431 = vunpack.c.h.b16 %v425
      %v432 = vunpack.c.l.b16 0
      %v433 = vunpack.c.h.b16 0
      %vm434 = vcmp.ne.s32.totalorder %v430, %v432
      %vm435 = vcmp.ne.s32.totalorder %v431, %v433
      %vm436 = vmpackc.low %vm435, %vm434
      %v437 = vunpack.c.l.b16 %v429
      %v438 = vunpack.c.h.b16 %v429
      %v439 = vunpack.c.l.b16 0
      %v440 = vunpack.c.h.b16 0
      %vm441 = vcmp.ne.s32.totalorder %v437, %v439
      %vm442 = vcmp.ne.s32.totalorder %v438, %v440
      %vm443 = vmpackc.low %vm442, %vm441
      %v444 = vunpack.c.l.b16 %v427
      %v445 = vunpack.c.h.b16 %v427
      %v446 = vunpack.c.l.b16 0
      %v447 = vunpack.c.h.b16 0
      %vm448 = vcmp.ne.s32.totalorder %v444, %v446
      %vm449 = vcmp.ne.s32.totalorder %v445, %v447
      %vm450 = vmpackc.low %vm449, %vm448
      %v451 = vsel %vm436, %v301, 0
      %v452 = vsel %vm443, %v296, 0
      %v453 = vsel %vm450, %v304, 0
      %454 = vrot.lane.b32.xlu0 %v332, 34
      %v455 = vpop.permute.xlu0 %454
      %456 = vrot.lane.b32.xlu0 %v333, 34
      %v457 = vpop.permute.xlu0 %456
      %vm458 = vcmask 277504
      %v459 = vsel %vm458, %v455, %v457
      %v460 = vunpack.c.l.b16 %v455
      %v461 = vunpack.c.h.b16 %v455
      %v462 = vunpack.c.l.b16 0
      %v463 = vunpack.c.h.b16 0
      %vm464 = vcmp.ne.s32.totalorder %v460, %v462
      %vm465 = vcmp.ne.s32.totalorder %v461, %v463
      %vm466 = vmpackc.low %vm465, %vm464
      %v467 = vunpack.c.l.b16 %v459
      %v468 = vunpack.c.h.b16 %v459
      %v469 = vunpack.c.l.b16 0
      %v470 = vunpack.c.h.b16 0
      %vm471 = vcmp.ne.s32.totalorder %v467, %v469
      %vm472 = vcmp.ne.s32.totalorder %v468, %v470
      %vm473 = vmpackc.low %vm472, %vm471
      %v474 = vunpack.c.l.b16 %v457
      %v475 = vunpack.c.h.b16 %v457
      %v476 = vunpack.c.l.b16 0
      %v477 = vunpack.c.h.b16 0
      %vm478 = vcmp.ne.s32.totalorder %v474, %v476
      %vm479 = vcmp.ne.s32.totalorder %v475, %v477
      %vm480 = vmpackc.low %vm479, %vm478
      %v481 = vsel %vm466, %v301, 0
      %v482 = vsel %vm473, %v296, 0
      %v483 = vsel %vm480, %v304, 0
      %v486 = vrot.slane %v301, 6
      %v487 = vrot.slane %v296, 6
      %v488 = vrot.slane %v304, 6
      %489 = vrot.lane.b32.xlu0 %v486, 127
      %v490 = vpop.permute.xlu0 %489
      %491 = vrot.lane.b32.xlu0 %v487, 127
      %v492 = vpop.permute.xlu0 %491
      %493 = vrot.lane.b32.xlu0 %v488, 127
      %v494 = vpop.permute.xlu0 %493
      %vm495 = vcmask 1039360
      %v496 = vsel %vm495, %v490, %v492
      %v497 = vsel %vm495, %v492, %v494
      %v501 = vrot.slane %v361, 4
      %v502 = vrot.slane %v362, 4
      %v503 = vrot.slane %v363, 4
      %504 = vrot.lane.b32.xlu0 %v501, 126
      %v505 = vpop.permute.xlu0 %504
      %506 = vrot.lane.b32.xlu0 %v502, 126
      %v507 = vpop.permute.xlu0 %506
      %508 = vrot.lane.b32.xlu0 %v503, 126
      %v509 = vpop.permute.xlu0 %508
      %vm510 = vcmask 1031168
      %v511 = vsel %vm510, %v505, %v507
      %v512 = vsel %vm510, %v507, %v509
      %v516 = vrot.slane %v391, 2
      %v517 = vrot.slane %v392, 2
      %v518 = vrot.slane %v393, 2
      %519 = vrot.lane.b32.xlu0 %v516, 112
      %v520 = vpop.permute.xlu0 %519
      %521 = vrot.lane.b32.xlu0 %v517, 112
      %v522 = vpop.permute.xlu0 %521
      %523 = vrot.lane.b32.xlu0 %v518, 112
      %v524 = vpop.permute.xlu0 %523
      %vm525 = vcmask 916480
      %v526 = vsel %vm525, %v520, %v522
      %v527 = vsel %vm525, %v522, %v524
      %528 = vrot.lane.b32.xlu0 %v301, 111
      %v529 = vpop.permute.xlu0 %528
      %530 = vrot.lane.b32.xlu0 %v296, 111
      %v531 = vpop.permute.xlu0 %530
      %532 = vrot.lane.b32.xlu0 %v304, 111
      %v533 = vpop.permute.xlu0 %532
      %vm534 = vcmask 908288
      %v535 = vsel %vm534, %v529, %v531
      %v536 = vsel %vm534, %v531, %v533
      %v540 = vrot.slane %v421, 6
      %v541 = vrot.slane %v422, 6
      %v542 = vrot.slane %v423, 6
      %543 = vrot.lane.b32.xlu0 %v540, 110
      %v544 = vpop.permute.xlu0 %543
      %545 = vrot.lane.b32.xlu0 %v541, 110
      %v546 = vpop.permute.xlu0 %545
      %547 = vrot.lane.b32.xlu0 %v542, 110
      %v548 = vpop.permute.xlu0 %547
      %vm549 = vcmask 900096
      %v550 = vsel %vm549, %v544, %v546
      %v551 = vsel %vm549, %v546, %v548
      %v555 = vrot.slane %v451, 4
      %v556 = vrot.slane %v452, 4
      %v557 = vrot.slane %v453, 4
      %558 = vrot.lane.b32.xlu0 %v555, 96
      %v559 = vpop.permute.xlu0 %558
      %560 = vrot.lane.b32.xlu0 %v556, 96
      %v561 = vpop.permute.xlu0 %560
      %562 = vrot.lane.b32.xlu0 %v557, 96
      %v563 = vpop.permute.xlu0 %562
      %vm564 = vcmask 785408
      %v565 = vsel %vm564, %v559, %v561
      %v566 = vsel %vm564, %v561, %v563
      %v567 = vrot.slane %v301, 2
      %v568 = vrot.slane %v296, 2
      %v569 = vrot.slane %v304, 2
      %570 = vrot.lane.b32.xlu0 %v567, 95
      %v571 = vpop.permute.xlu0 %570
      %572 = vrot.lane.b32.xlu0 %v568, 95
      %v573 = vpop.permute.xlu0 %572
      %574 = vrot.lane.b32.xlu0 %v569, 95
      %v575 = vpop.permute.xlu0 %574
      %vm576 = vcmask 777216
      %v577 = vsel %vm576, %v571, %v573
      %v578 = vsel %vm576, %v573, %v575
      %582 = vrot.lane.b32.xlu0 %v481, 94
      %v583 = vpop.permute.xlu0 %582
      %584 = vrot.lane.b32.xlu0 %v482, 94
      %v585 = vpop.permute.xlu0 %584
      %586 = vrot.lane.b32.xlu0 %v483, 94
      %v587 = vpop.permute.xlu0 %586
      %vm588 = vcmask 769024
      %v589 = vsel %vm588, %v583, %v585
      %v590 = vsel %vm588, %v585, %v587
      %vm591 = vcmask 1041408
      %v594 = vsel %vm591, %v326, %v496
      %v597 = vsel %vm591, %v327, %v497
      %vm598 = vcmask 1043456
      %v600 = vsel %vm598, %v594, %v511
      %v602 = vsel %vm598, %v597, %v512
      %vm603 = vcmask 1045504
      %v605 = vsel %vm603, %v600, %v526
      %v608 = vsel %vm603, %v602, %v527
      %v612 = vsel %vm591, %v535, %v550
      %v615 = vsel %vm591, %v536, %v551
      %v617 = vsel %vm598, %v612, %v565
      %v619 = vsel %vm598, %v615, %v566
      %v621 = vsel %vm603, %v617, %v577
      %v624 = vsel %vm603, %v619, %v578
      %v626 = vld [vmem:[%s1] sm:$0xf]
      %v627 = vld [vmem:[%s4] sm:$0xff]
      %629 = vset.pattern.permute.xlu0 0
      %630 = vperm.xlu0 %629, %v627
      %v631 = vpop.permute.xlu0 %630
      %vm633 = vcmask 293888
      %v635 = vsel %vm633, %v626, 0
      %v638 = vsel %vm591, %v589, 0
      %v641 = vsel %vm591, %v590, 0
      %643 = vmatpush.bf16.msra.mxu0 0
      %644 = vmatpush.bf16.msra.mxu0 0
      %645 = vmatpush.bf16.msra.mxu0 0
      %646 = vmatpush.bf16.msra.mxu0 0
      %647 = vmatpush.bf16.msra.mxu0 0
      %648 = vmatpush.bf16.msra.mxu0 %v638
      %649 = vmatpush.bf16.msra.mxu0 %v621
      %650 = vmatpush.bf16.msra.mxu0 %v605
      %651 = vmatmul.bf16.gmra.mxu0 %v635
      %v652 = vpop.f32.mrf.mxu0
      %v653 = vadd.f32 %v631, %v652
      %v654 = vpop.f32.mrf.mxu0
      %655 = vdwg.mxu0
      %656 = vmatpush.bf16.msra.mxu0 0
      %657 = vmatpush.bf16.msra.mxu0 0
      %658 = vmatpush.bf16.msra.mxu0 0
      %659 = vmatpush.bf16.msra.mxu0 0
      %660 = vmatpush.bf16.msra.mxu0 0
      %661 = vmatpush.bf16.msra.mxu0 %v641
      %662 = vmatpush.bf16.msra.mxu0 %v624
      %663 = vmatpush.bf16.msra.mxu0 %v608
      %664 = vmatmul.bf16.gmra.mxu0 %v635
      %v665 = vpop.f32.mrf.mxu0
      %v666 = vadd.f32 %v631, %v665
      %v667 = vpop.f32.mrf.mxu0
      %668 = vdwg.mxu0
      %670 = vst [vmem:[#allocation1] ss:$2 sm:$0xff] %v228
      %v671 = vld.sshfl [vmem:[#allocation1] sm:$0xff pattern:$0x75316420]
      %v672 = vld.sshfl [vmem:[#allocation1 + $0x8] sm:$0xff pattern:$0x75316420]
      %v677 = vrot.slane %v653, 4
      %v678 = vrot.slane %v666, 4
      %v681 = vsel %vm598, %v671, %v677
      %v682 = vsel %vm598, %v672, %v678
      %683 = vst [vmem:[%s224] sm:$0xff] %v681
      %684 = vst [vmem:[%s224 + $0x8] sm:$0xff] %v682
      %685 = vst [vmem:[%s224 + $0x10] sm:$0xf] %v677
      %686 = vst [vmem:[%s224 + $0x18] sm:$0xf] %v678
      %p687 = scmp.lt.s32.totalorder %s16, 1
      %s688 = scalar_select %p687, %s16, 1
      %s689 = smul.addr %s688, 4
      %s690 = smul.addr %s689, 8
      %s691 = scalar_lea.vmem %s5, %s690
      // Predicated region
      $region41: #{conv_block.1} parent=39 // pred_check
        %p692 = pneg %p144
      $region42: #{conv_block.1} parent=39 // pred_check_branch
        %694 = sbr.rel (%p692) target = $region44
      $region43: #{conv_block.1} parent=39 // pred_region
        _
      $region44: #{conv_block.1} parent=39 // pred_fallthru
        _
    $region40: #{conv_block.1} parent=5 // pred_fallthru
      _
    %p695 = scmp.le.s32.totalorder 2, %s11
    // Predicated region
    $region45: #{conv_block.1} parent=5 // pred_check
      %p696 = pneg %p695
    $region46: #{conv_block.1} parent=5 // pred_check_branch
      %698 = sbr.rel (%p696) target = $region48
    $region47: #{conv_block.1} parent=5 // pred_region
      %s699 = ssub.s32 %s11, 2
      // Predicated region
      $region49: #{conv_block.1} parent=47 // pred_check
        %p700 = pneg %p150
      $region50: #{conv_block.1} parent=47 // pred_check_branch
        %702 = sbr.rel (%p700) target = $region52
      $region51: #{conv_block.1} parent=47 // pred_region
        %p703 = scmp.lt.s32.totalorder %s17, 1
        %s704 = scalar_select %p703, %s17, 1
        %s705 = smul.addr %s704, 4
        %s706 = smul.addr %s705, 8
        %s707 = scalar_lea.vmem %s5, %s706
      $region52: #{conv_block.1} parent=47 // pred_fallthru
        _
    $region48: #{conv_block.1} parent=5 // pred_fallthru
      _
  $region6: #{conv_block.1} parent=0 // loop_footer
    %s15 = sadd.s32 1, %s11
  $region7: #{conv_block.1} parent=0 // loop_footer_branch
    %10 = sbr.rel target = $region3
  $region8: #{conv_block.1} parent=0 // loop_exit
    _

</llo_original>
